<compile_context>
chip_gen: v7x
topology: tpu7x:2x2x1
jax: 0.10.0
libtpu: 0.0.40
codegen_flags: <defaults>
</compile_context>

<pallas_src>
import jax
import jax.numpy as jnp
from jax.experimental import pallas as pl
from jax.experimental.pallas import tpu as pltpu

HIDDEN = 64
SUBLANE = 8     # vreg sublane height (f32)


def _round_up(x, m):
    return (x + m - 1) // m * m


# --------------------------------------------------------------------------
# Kernel: one batch tile through the whole 3-layer MLP.
# --------------------------------------------------------------------------
def critic_kernel(obs_ref, w1_ref, b1_ref, w2_ref, b2_ref, w3_ref, b3_ref,
                  out_ref):
    x = obs_ref[...]                                               # (TB, n_obs)
    h1 = jnp.dot(x, w1_ref[...], preferred_element_type=jnp.float32)
    h1 = jnp.maximum(h1 + b1_ref[...], 0.0)                        # (TB, 64)
    h2 = jnp.dot(h1, w2_ref[...], preferred_element_type=jnp.float32)
    h2 = jnp.maximum(h2 + b2_ref[...], 0.0)                        # (TB, 64)
    out = jnp.dot(h2, w3_ref[...], preferred_element_type=jnp.float32)
    out_ref[...] = (out + b3_ref[...]).astype(out_ref.dtype)       # (TB, n_act)


# --------------------------------------------------------------------------
# Wrapper
# --------------------------------------------------------------------------
def critic_forward(obs, params, *, tile_b=1024):
    """obs: (B, n_obs) f32. params: from init_params(). Returns (B, n_act)."""
    w1, b1 = params["w1"], params["b1"]
    w2, b2 = params["w2"], params["b2"]
    w3, b3 = params["w3"], params["b3"]

    B, n_obs = obs.shape
    n_act = w3.shape[1]

    # Batch tile: multiple of the sublane height; capped at ~half the batch so
    # there are >=2 grid steps (v7x megacore sharding) once B > SUBLANE, and
    # large enough (default 1024) to amortize per-grid-step overhead.
    half = _round_up(pl.cdiv(B, 2), SUBLANE)
    tb = max(SUBLANE, min(_round_up(tile_b, SUBLANE), half))
    grid = (pl.cdiv(B, tb),)

    def resident(shape):
        # Weight/bias blocks: full array, same block every step -> VMEM-resident.
        return pl.BlockSpec(shape, lambda i: (0, 0))

    out = pl.pallas_call(
        critic_kernel,
        out_shape=jax.ShapeDtypeStruct((B, n_act), jnp.float32),
        grid=grid,
        in_specs=[
            pl.BlockSpec((tb, n_obs), lambda i: (i, 0)),   # obs tile (true width)
            resident(w1.shape), resident(b1.shape),
            resident(w2.shape), resident(b2.shape),
            resident(w3.shape), resident(b3.shape),
        ],
        out_specs=pl.BlockSpec((tb, n_act), lambda i: (i, 0)),  # true width
        compiler_params=pltpu.CompilerParams(
            dimension_semantics=("parallel",),   # megacore sharding on v7x
        ),
    )(obs, w1, b1, w2, b2, w3, b3)

    return out


# --------------------------------------------------------------------------
# Params
# --------------------------------------------------------------------------
def init_params(key, n_obs, n_act, h_dim=HIDDEN):
    """Deterministic init mirroring nn.Linear shapes (stored as (in, out))."""
    ks = jax.random.split(key, 6)

    def lin(kw, kb, fan_in, fan_out):
        bound = 1.0 / jnp.sqrt(fan_in)
        w = jax.random.uniform(kw, (fan_in, fan_out), jnp.float32, -bound, bound)
        b = jax.random.uniform(kb, (1, fan_out), jnp.float32, -bound, bound)
        return w, b

    w1, b1 = lin(ks[0], ks[1], n_obs, h_dim)
    w2, b2 = lin(ks[2], ks[3], h_dim, h_dim)
    w3, b3 = lin(ks[4], ks[5], h_dim, n_act)
    return {"w1": w1, "b1": b1, "w2": w2, "b2": b2, "w3": w3, "b3": b3}


def critic_reference(obs, p):
    h1 = jnp.maximum(obs @ p["w1"] + p["b1"], 0.0)
    h2 = jnp.maximum(h1 @ p["w2"] + p["b2"], 0.0)
    return h2 @ p["w3"] + p["b3"]


if __name__ == "__main__":
    key = jax.random.PRNGKey(0)
    n_obs, n_act = 16, 4

    k_obs, k_obs2, k_par = jax.random.split(key, 3)
    params = init_params(k_par, n_obs, n_act)

    # Small batch (single grid step, block == array rows).
    B = 8
    obs = jax.random.normal(k_obs, (B, n_obs), jnp.float32)
    out = jax.block_until_ready(critic_forward(obs, params))
    ref = critic_reference(obs, params)
    assert out.shape == (B, n_act)
    assert jnp.allclose(out, ref, atol=1e-5, rtol=1e-5)

    # Non-multiple batch: tb caps at 16 -> 2 grid steps, partial tail block.
    B2 = 20
    obs2 = jax.random.normal(k_obs2, (B2, n_obs), jnp.float32)
    out2 = jax.block_until_ready(critic_forward(obs2, params))
    ref2 = critic_reference(obs2, params)
    assert out2.shape == (B2, n_act)
    assert jnp.allclose(out2, ref2, atol=1e-5, rtol=1e-5)

    print("KERNEL_OK")
</pallas_src>

<mosaic_0001>
module attributes {stable_mosaic.version = 11 : i64} {
  func.func @critic_kernel(%arg0: i32, %arg1: memref<8x16xf32, #tpu.memory_space<vmem>>, %arg2: memref<16x64xf32, #tpu.memory_space<vmem>>, %arg3: memref<1x64xf32, #tpu.memory_space<vmem>>, %arg4: memref<64x64xf32, #tpu.memory_space<vmem>>, %arg5: memref<1x64xf32, #tpu.memory_space<vmem>>, %arg6: memref<64x4xf32, #tpu.memory_space<vmem>>, %arg7: memref<1x4xf32, #tpu.memory_space<vmem>>, %arg8: memref<8x4xf32, #tpu.memory_space<vmem>>) attributes {dimension_semantics = [#tpu.dimension_semantics<parallel>], iteration_bounds = array<i64: 1>, scalar_prefetch = 0 : i64, scratch_operands = 0 : i64, tpu.core_type = #tpu.core_type<tc>, window_params = [{transform_indices = @transform_0, window_bounds = array<i64: 8, 16>}, {pipeline_mode = #tpu.pipeline_mode<synchronous>, transform_indices = @transform_1, window_bounds = array<i64: 16, 64>}, {pipeline_mode = #tpu.pipeline_mode<synchronous>, transform_indices = @transform_2, window_bounds = array<i64: 1, 64>}, {pipeline_mode = #tpu.pipeline_mode<synchronous>, transform_indices = @transform_3, window_bounds = array<i64: 64, 64>}, {pipeline_mode = #tpu.pipeline_mode<synchronous>, transform_indices = @transform_4, window_bounds = array<i64: 1, 64>}, {pipeline_mode = #tpu.pipeline_mode<synchronous>, transform_indices = @transform_5, window_bounds = array<i64: 64, 4>}, {pipeline_mode = #tpu.pipeline_mode<synchronous>, transform_indices = @transform_6, window_bounds = array<i64: 1, 4>}, {transform_indices = @transform_7, window_bounds = array<i64: 8, 4>}]} {
    %c0 = arith.constant 0 : index
    %c0_0 = arith.constant 0 : index
    %0 = vector.load %arg1[%c0, %c0_0] : memref<8x16xf32, #tpu.memory_space<vmem>>, vector<8x16xf32>
    %c0_1 = arith.constant 0 : index
    %c0_2 = arith.constant 0 : index
    %1 = vector.load %arg2[%c0_1, %c0_2] : memref<16x64xf32, #tpu.memory_space<vmem>>, vector<16x64xf32>
    %cst = arith.constant dense<0.000000e+00> : vector<8x64xf32>
    %2 = tpu.matmul %0, %1, %cst {dimension_numbers = #tpu.dot_dimension_numbers<[1], [0], [0], [1], [0, 0, 1, 1], [], []>} : vector<8x16xf32>, vector<16x64xf32>, vector<8x64xf32> -> vector<8x64xf32>
    %c0_3 = arith.constant 0 : index
    %c0_4 = arith.constant 0 : index
    %3 = vector.load %arg3[%c0_3, %c0_4] : memref<1x64xf32, #tpu.memory_space<vmem>>, vector<1x64xf32>
    %4 = vector.broadcast %3 : vector<1x64xf32> to vector<8x64xf32>
    %5 = arith.addf %2, %4 : vector<8x64xf32>
    %cst_5 = arith.constant 0.000000e+00 : f32
    %6 = vector.broadcast %cst_5 : f32 to vector<8x64xf32>
    %7 = arith.maximumf %5, %6 : vector<8x64xf32>
    %c0_6 = arith.constant 0 : index
    %c0_7 = arith.constant 0 : index
    %8 = vector.load %arg4[%c0_6, %c0_7] : memref<64x64xf32, #tpu.memory_space<vmem>>, vector<64x64xf32>
    %cst_8 = arith.constant dense<0.000000e+00> : vector<8x64xf32>
    %9 = tpu.matmul %7, %8, %cst_8 {dimension_numbers = #tpu.dot_dimension_numbers<[1], [0], [0], [1], [0, 0, 1, 1], [], []>} : vector<8x64xf32>, vector<64x64xf32>, vector<8x64xf32> -> vector<8x64xf32>
    %c0_9 = arith.constant 0 : index
    %c0_10 = arith.constant 0 : index
    %10 = vector.load %arg5[%c0_9, %c0_10] : memref<1x64xf32, #tpu.memory_space<vmem>>, vector<1x64xf32>
    %11 = vector.broadcast %10 : vector<1x64xf32> to vector<8x64xf32>
    %12 = arith.addf %9, %11 : vector<8x64xf32>
    %cst_11 = arith.constant 0.000000e+00 : f32
    %13 = vector.broadcast %cst_11 : f32 to vector<8x64xf32>
    %14 = arith.maximumf %12, %13 : vector<8x64xf32>
    %c0_12 = arith.constant 0 : index
    %c0_13 = arith.constant 0 : index
    %15 = vector.load %arg6[%c0_12, %c0_13] : memref<64x4xf32, #tpu.memory_space<vmem>>, vector<64x4xf32>
    %cst_14 = arith.constant dense<0.000000e+00> : vector<8x4xf32>
    %16 = tpu.matmul %14, %15, %cst_14 {dimension_numbers = #tpu.dot_dimension_numbers<[1], [0], [0], [1], [0, 0, 1, 1], [], []>} : vector<8x64xf32>, vector<64x4xf32>, vector<8x4xf32> -> vector<8x4xf32>
    %c0_15 = arith.constant 0 : index
    %c0_16 = arith.constant 0 : index
    %17 = vector.load %arg7[%c0_15, %c0_16] : memref<1x4xf32, #tpu.memory_space<vmem>>, vector<1x4xf32>
    %18 = vector.broadcast %17 : vector<1x4xf32> to vector<8x4xf32>
    %19 = arith.addf %16, %18 : vector<8x4xf32>
    %c0_17 = arith.constant 0 : index
    %c0_18 = arith.constant 0 : index
    %20 = vector.load %arg8[%c0_17, %c0_18] : memref<8x4xf32, #tpu.memory_space<vmem>>, vector<8x4xf32>
    tpu.vector_store %arg8[%c0_17, %c0_18], %19 {strides = array<i32>} : memref<8x4xf32, #tpu.memory_space<vmem>>, vector<8x4xf32>,
    return
  }
  func.func @transform_0(%arg0: i32) -> (i32, i32) {
    %c0_i32 = arith.constant 0 : i32
    %c0_i32_0 = arith.constant 0 : i32
    return %arg0, %c0_i32 : i32, i32
  }
  func.func @transform_1(%arg0: i32) -> (i32, i32) {
    %c0_i32 = arith.constant 0 : i32
    %c0_i32_0 = arith.constant 0 : i32
    %c0_i32_1 = arith.constant 0 : i32
    return %c0_i32, %c0_i32_0 : i32, i32
  }
  func.func @transform_2(%arg0: i32) -> (i32, i32) {
    %c0_i32 = arith.constant 0 : i32
    %c0_i32_0 = arith.constant 0 : i32
    %c0_i32_1 = arith.constant 0 : i32
    return %c0_i32, %c0_i32_0 : i32, i32
  }
  func.func @transform_3(%arg0: i32) -> (i32, i32) {
    %c0_i32 = arith.constant 0 : i32
    %c0_i32_0 = arith.constant 0 : i32
    %c0_i32_1 = arith.constant 0 : i32
    return %c0_i32, %c0_i32_0 : i32, i32
  }
  func.func @transform_4(%arg0: i32) -> (i32, i32) {
    %c0_i32 = arith.constant 0 : i32
    %c0_i32_0 = arith.constant 0 : i32
    %c0_i32_1 = arith.constant 0 : i32
    return %c0_i32, %c0_i32_0 : i32, i32
  }
  func.func @transform_5(%arg0: i32) -> (i32, i32) {
    %c0_i32 = arith.constant 0 : i32
    %c0_i32_0 = arith.constant 0 : i32
    %c0_i32_1 = arith.constant 0 : i32
    return %c0_i32, %c0_i32_0 : i32, i32
  }
  func.func @transform_6(%arg0: i32) -> (i32, i32) {
    %c0_i32 = arith.constant 0 : i32
    %c0_i32_0 = arith.constant 0 : i32
    %c0_i32_1 = arith.constant 0 : i32
    return %c0_i32, %c0_i32_0 : i32, i32
  }
  func.func @transform_7(%arg0: i32) -> (i32, i32) {
    %c0_i32 = arith.constant 0 : i32
    %c0_i32_0 = arith.constant 0 : i32
    return %arg0, %c0_i32 : i32, i32
  }
}

</mosaic_0001>

<llo_original>
// kernel: tpu_custom_call.1
$region0: #{tpu_custom_call.1}
  #allocation0 [shape = 'u32[]', space=smem, size = 0x4, offset = 0x4, fixed_abs, tag = 'smem constant byte address 0x4 - core index']
  #allocation1 [shape = 'u32[144,128]{1,0:T(1,128)}', space=vmem, size = 0x12000, scoped, tag = 'internal scratch']
  %s0 = inlined_call_operand.vmem [shape: f32[8,16], index: 0, kind: input, shape index: {}]
  %s1 = inlined_call_operand.hbm [shape: f32[16,64], index: 1, kind: input, shape index: {}]
  %s2 = inlined_call_operand.vmem [shape: f32[1,64], index: 2, kind: input, shape index: {}]
  %s3 = inlined_call_operand.vmem [shape: f32[64,64], index: 3, kind: input, shape index: {}]
  %s4 = inlined_call_operand.vmem [shape: f32[1,64], index: 4, kind: input, shape index: {}]
  %s5 = inlined_call_operand.vmem [shape: f32[64,4], index: 5, kind: input, shape index: {}]
  %s6 = inlined_call_operand.vmem [shape: f32[1,4], index: 6, kind: input, shape index: {}]
  %s7 = inlined_call_operand.vmem [shape: f32[8,4], index: 7, kind: output, shape index: {}]
  %s8 = sld [smem:[#allocation0]]
  $region42: #{tpu_custom_call.1} parent=0
    _
  %s10 = ssub.s32 1, %s8
  %s11 = scalar_select 0, %s10, %s8
  $region1: #{tpu_custom_call.1} parent=0
    #allocation2 [shape = 'u8[8192]{0}', space=vmem, size = 0x2000, scoped, tag = 'input window, operand 1, single buffered']
    #allocation3 [shape = 's32[1]{0}', space=sflag, size = 0x4, scoped, tag = 'scoped memory for tpu_custom_call.1']
    %12 = vsyncpa [#allocation3], 0
    // Predicated region
    $region2: #{tpu_custom_call.1} parent=1 // pred_check
      _
    $region3: #{tpu_custom_call.1} parent=1 // pred_check_branch
      %14 = sbr.rel (0) target = $region5
    $region4: #{tpu_custom_call.1} parent=1 // pred_region
      _
    $region5: #{tpu_custom_call.1} parent=1 // pred_fallthru
      _
    // Predicated region
    $region6: #{tpu_custom_call.1} parent=1 // pred_check
      _
    $region7: #{tpu_custom_call.1} parent=1 // pred_check_branch
      %16 = sbr.rel (0) target = $region9
    $region8: #{tpu_custom_call.1} parent=1 // pred_region
      %s18 = ssub.s32 256, 256
      %19 = vsyncadd [#allocation3], %s18
      %s20 = sshll.u32 [#allocation2], 4
      %s21 = int_to_ptr.vmem [resolvable:$true] %s20
      %26 = dma.hbm_to_vmem [thread:$0]  %s1, 256, %s21, [#allocation3], 128, 128, 8
    $region9: #{tpu_custom_call.1} parent=1 // pred_fallthru
      _
    // Predicated region
    $region10: #{tpu_custom_call.1} parent=1 // pred_check
      _
    $region11: #{tpu_custom_call.1} parent=1 // pred_check_branch
      %28 = sbr.rel (0) target = $region13
    $region12: #{tpu_custom_call.1} parent=1 // pred_region
      _
    $region13: #{tpu_custom_call.1} parent=1 // pred_fallthru
      _
    // Predicated region
    $region14: #{tpu_custom_call.1} parent=1 // pred_check
      _
    $region15: #{tpu_custom_call.1} parent=1 // pred_check_branch
      %30 = sbr.rel (0) target = $region17
    $region16: #{tpu_custom_call.1} parent=1 // pred_region
      _
    $region17: #{tpu_custom_call.1} parent=1 // pred_fallthru
      _
    // Predicated region
    $region18: #{tpu_custom_call.1} parent=1 // pred_check
      _
    $region19: #{tpu_custom_call.1} parent=1 // pred_check_branch
      %32 = sbr.rel (0) target = $region21
    $region20: #{tpu_custom_call.1} parent=1 // pred_region
      _
    $region21: #{tpu_custom_call.1} parent=1 // pred_fallthru
      _
    // Predicated region
    $region22: #{tpu_custom_call.1} parent=1 // pred_check
      _
    $region23: #{tpu_custom_call.1} parent=1 // pred_check_branch
      %34 = sbr.rel (0) target = $region25
    $region24: #{tpu_custom_call.1} parent=1 // pred_region
      _
    $region25: #{tpu_custom_call.1} parent=1 // pred_fallthru
      _
    // Predicated region
    $region26: #{tpu_custom_call.1} parent=1 // pred_check
      _
    $region27: #{tpu_custom_call.1} parent=1 // pred_check_branch
      %36 = sbr.rel (0) target = $region29
    $region28: #{tpu_custom_call.1} parent=1 // pred_region
      _
    $region29: #{tpu_custom_call.1} parent=1 // pred_fallthru
      _
    // Predicated region
    $region30: #{tpu_custom_call.1} parent=1 // pred_check
      _
    $region31: #{tpu_custom_call.1} parent=1 // pred_check_branch
      %38 = sbr.rel (0) target = $region33
    $region32: #{tpu_custom_call.1} parent=1 // pred_region
      %39 = dma.done [#allocation3], 256
    $region33: #{tpu_custom_call.1} parent=1 // pred_fallthru
      _
    %v40 = vld [vmem:[%s0] sm:$0xff]
    %v41 = vld [vmem:[#allocation2] sm:$0xff]
    %v42 = vld [vmem:[#allocation2 + $0x8] sm:$0xff]
    %v43 = vld [vmem:[%s2] sm:$0x1]
    %v45 = vlaneseq
    %v46 = vshrl.u32 %v45, 7
    %v47 = vsub.s32 0, %v46
    %v48 = vrot.slane %v43, %v47
    %vm50 = vcmask 130048
    %v52 = vsel %vm50, %v40, 0
    %54 = vmatprep.subr.mxu0 0.0
    %55 = vmatpush1.msra.mxu0 %v41
    %56 = vmatprep.subr.mxu0 0.0
    %57 = vmatpush1.msra.mxu0 %v42
    %58 = vmatprep.subr.mxu0 0.0
    %59 = vmatpush1.msra.mxu0 0.0
    %60 = vmatprep.subr.mxu0 0.0
    %61 = vmatpush1.msra.mxu0 0.0
    %62 = vmatprep.subr.mxu0 0.0
    %63 = vmatpush1.msra.mxu0 0.0
    %64 = vmatprep.subr.mxu0 0.0
    %65 = vmatpush1.msra.mxu0 0.0
    %66 = vmatprep.subr.mxu0 0.0
    %67 = vmatpush1.msra.mxu0 0.0
    %68 = vmatprep.subr.mxu0 0.0
    %69 = vmatpush1.msra.mxu0 0.0
    %70 = vmatprep.subr.mxu0 0.0
    %71 = vmatpush1.msra.mxu0 0.0
    %72 = vmatprep.subr.mxu0 0.0
    %73 = vmatpush1.msra.mxu0 0.0
    %74 = vmatprep.subr.mxu0 0.0
    %75 = vmatpush1.msra.mxu0 0.0
    %76 = vmatprep.subr.mxu0 0.0
    %77 = vmatpush1.msra.mxu0 0.0
    %78 = vmatprep.subr.mxu0 0.0
    %79 = vmatpush1.msra.mxu0 0.0
    %80 = vmatprep.subr.mxu0 0.0
    %81 = vmatpush1.msra.mxu0 0.0
    %82 = vmatprep.subr.mxu0 0.0
    %83 = vmatpush1.msra.mxu0 0.0
    %84 = vmatprep.subr.mxu0 0.0
    %85 = vmatpush1.msra.mxu0 0.0
    %86 = vmatprep.subr.mxu0 0.0
    %87 = vmatpush1.msra.mxu0 0.0
    %88 = vmatprep.subr.mxu0 0.0
    %89 = vmatpush1.msra.mxu0 0.0
    %90 = vmatprep.subr.mxu0 0.0
    %91 = vmatpush1.msra.mxu0 0.0
    %92 = vmatprep.subr.mxu0 0.0
    %93 = vmatpush1.msra.mxu0 0.0
    %94 = vmatprep.subr.mxu0 0.0
    %95 = vmatpush1.msra.mxu0 0.0
    %96 = vmatprep.subr.mxu0 0.0
    %97 = vmatpush1.msra.mxu0 0.0
    %98 = vmatprep.subr.mxu0 0.0
    %99 = vmatpush1.msra.mxu0 0.0
    %100 = vmatprep.subr.mxu0 0.0
    %101 = vmatpush1.msra.mxu0 0.0
    %102 = vmatprep.subr.mxu0 0.0
    %103 = vmatpush1.msra.mxu0 0.0
    %104 = vmatprep.subr.mxu0 0.0
    %105 = vmatpush1.msra.mxu0 0.0
    %106 = vmatprep.subr.mxu0 0.0
    %107 = vmatpush1.msra.mxu0 0.0
    %108 = vmatprep.subr.mxu0 0.0
    %109 = vmatpush1.msra.mxu0 0.0
    %110 = vmatprep.subr.mxu0 0.0
    %111 = vmatpush1.msra.mxu0 0.0
    %112 = vmatprep.subr.mxu0 0.0
    %113 = vmatpush1.msra.mxu0 0.0
    %114 = vmatprep.subr.mxu0 0.0
    %115 = vmatpush1.msra.mxu0 0.0
    %116 = vmatprep.subr.mxu0 0.0
    %117 = vmatpush1.msra.mxu0 0.0
    %118 = vmatprep.mubr.f32.mxu0 0.0
    %119 = vmatmul.mubr.f32.gmra.mrb[0].mxu0 %v52
    %v120 = vpop.f32.mrb[0].mxu0
    %v121 = vadd.f32 %v48, %v120
    %v122 = vpop.f32.mrb[0].mxu0
    %123 = vdwg.mxu0
    %v124 = vmax.f32 %v121, 0.0
    %v125 = vld [vmem:[%s3] sm:$0xff]
    %v126 = vld [vmem:[%s3 + $0x8] sm:$0xff]
    %v127 = vld [vmem:[%s3 + $0x10] sm:$0xff]
    %v128 = vld [vmem:[%s3 + $0x18] sm:$0xff]
    %v129 = vld [vmem:[%s3 + $0x20] sm:$0xff]
    %v130 = vld [vmem:[%s3 + $0x28] sm:$0xff]
    %v131 = vld [vmem:[%s3 + $0x30] sm:$0xff]
    %v132 = vld [vmem:[%s3 + $0x38] sm:$0xff]
    %v133 = vld [vmem:[%s4] sm:$0x1]
    %v135 = vlaneseq
    %v136 = vshrl.u32 %v135, 7
    %v137 = vsub.s32 0, %v136
    %v138 = vrot.slane %v133, %v137
    %vm140 = vcmask 523264
    %v142 = vsel %vm140, %v124, 0
    %144 = vmatprep.subr.mxu0 0.0
    %145 = vmatpush1.msra.mxu0 %v125
    %146 = vmatprep.subr.mxu0 0.0
    %147 = vmatpush1.msra.mxu0 %v126
    %148 = vmatprep.subr.mxu0 0.0
    %149 = vmatpush1.msra.mxu0 %v127
    %150 = vmatprep.subr.mxu0 0.0
    %151 = vmatpush1.msra.mxu0 %v128
    %152 = vmatprep.subr.mxu0 0.0
    %153 = vmatpush1.msra.mxu0 %v129
    %154 = vmatprep.subr.mxu0 0.0
    %155 = vmatpush1.msra.mxu0 %v130
    %156 = vmatprep.subr.mxu0 0.0
    %157 = vmatpush1.msra.mxu0 %v131
    %158 = vmatprep.subr.mxu0 0.0
    %159 = vmatpush1.msra.mxu0 %v132
    %160 = vmatprep.subr.mxu0 0.0
    %161 = vmatpush1.msra.mxu0 0.0
    %162 = vmatprep.subr.mxu0 0.0
    %163 = vmatpush1.msra.mxu0 0.0
    %164 = vmatprep.subr.mxu0 0.0
    %165 = vmatpush1.msra.mxu0 0.0
    %166 = vmatprep.subr.mxu0 0.0
    %167 = vmatpush1.msra.mxu0 0.0
    %168 = vmatprep.subr.mxu0 0.0
    %169 = vmatpush1.msra.mxu0 0.0
    %170 = vmatprep.subr.mxu0 0.0
    %171 = vmatpush1.msra.mxu0 0.0
    %172 = vmatprep.subr.mxu0 0.0
    %173 = vmatpush1.msra.mxu0 0.0
    %174 = vmatprep.subr.mxu0 0.0
    %175 = vmatpush1.msra.mxu0 0.0
    %176 = vmatprep.subr.mxu0 0.0
    %177 = vmatpush1.msra.mxu0 0.0
    %178 = vmatprep.subr.mxu0 0.0
    %179 = vmatpush1.msra.mxu0 0.0
    %180 = vmatprep.subr.mxu0 0.0
    %181 = vmatpush1.msra.mxu0 0.0
    %182 = vmatprep.subr.mxu0 0.0
    %183 = vmatpush1.msra.mxu0 0.0
    %184 = vmatprep.subr.mxu0 0.0
    %185 = vmatpush1.msra.mxu0 0.0
    %186 = vmatprep.subr.mxu0 0.0
    %187 = vmatpush1.msra.mxu0 0.0
    %188 = vmatprep.subr.mxu0 0.0
    %189 = vmatpush1.msra.mxu0 0.0
    %190 = vmatprep.subr.mxu0 0.0
    %191 = vmatpush1.msra.mxu0 0.0
    %192 = vmatprep.subr.mxu0 0.0
    %193 = vmatpush1.msra.mxu0 0.0
    %194 = vmatprep.subr.mxu0 0.0
    %195 = vmatpush1.msra.mxu0 0.0
    %196 = vmatprep.subr.mxu0 0.0
    %197 = vmatpush1.msra.mxu0 0.0
    %198 = vmatprep.subr.mxu0 0.0
    %199 = vmatpush1.msra.mxu0 0.0
    %200 = vmatprep.subr.mxu0 0.0
    %201 = vmatpush1.msra.mxu0 0.0
    %202 = vmatprep.subr.mxu0 0.0
    %203 = vmatpush1.msra.mxu0 0.0
    %204 = vmatprep.subr.mxu0 0.0
    %205 = vmatpush1.msra.mxu0 0.0
    %206 = vmatprep.subr.mxu0 0.0
    %207 = vmatpush1.msra.mxu0 0.0
    %208 = vmatprep.mubr.f32.mxu0 0.0
    %209 = vmatmul.mubr.f32.gmra.mrb[0].mxu0 %v142
    %v210 = vpop.f32.mrb[0].mxu0
    %v211 = vadd.f32 %v138, %v210
    %v212 = vpop.f32.mrb[0].mxu0
    %213 = vdwg.mxu0
    %v214 = vmax.f32 %v211, 0.0
    %v215 = vld [vmem:[%s5] sm:$0xff]
    %v216 = vld [vmem:[%s5 + $0x8] sm:$0xff]
    %v217 = vld [vmem:[%s5 + $0x10] sm:$0xff]
    %v218 = vld [vmem:[%s5 + $0x18] sm:$0xff]
    %v219 = vld [vmem:[%s5 + $0x20] sm:$0xff]
    %v220 = vld [vmem:[%s5 + $0x28] sm:$0xff]
    %v221 = vld [vmem:[%s5 + $0x30] sm:$0xff]
    %v222 = vld [vmem:[%s5 + $0x38] sm:$0xff]
    %v223 = vld [vmem:[%s6] sm:$0x1]
    %v225 = vlaneseq
    %v226 = vshrl.u32 %v225, 7
    %v227 = vsub.s32 0, %v226
    %v228 = vrot.slane %v223, %v227
    %v231 = vsel %vm140, %v214, 0
    %233 = vmatprep.subr.mxu0 0.0
    %234 = vmatpush1.msra.mxu0 %v215
    %235 = vmatprep.subr.mxu0 0.0
    %236 = vmatpush1.msra.mxu0 %v216
    %237 = vmatprep.subr.mxu0 0.0
    %238 = vmatpush1.msra.mxu0 %v217
    %239 = vmatprep.subr.mxu0 0.0
    %240 = vmatpush1.msra.mxu0 %v218
    %241 = vmatprep.subr.mxu0 0.0
    %242 = vmatpush1.msra.mxu0 %v219
    %243 = vmatprep.subr.mxu0 0.0
    %244 = vmatpush1.msra.mxu0 %v220
    %245 = vmatprep.subr.mxu0 0.0
    %246 = vmatpush1.msra.mxu0 %v221
    %247 = vmatprep.subr.mxu0 0.0
    %248 = vmatpush1.msra.mxu0 %v222
    %249 = vmatprep.subr.mxu0 0.0
    %250 = vmatpush1.msra.mxu0 0.0
    %251 = vmatprep.subr.mxu0 0.0
    %252 = vmatpush1.msra.mxu0 0.0
    %253 = vmatprep.subr.mxu0 0.0
    %254 = vmatpush1.msra.mxu0 0.0
    %255 = vmatprep.subr.mxu0 0.0
    %256 = vmatpush1.msra.mxu0 0.0
    %257 = vmatprep.subr.mxu0 0.0
    %258 = vmatpush1.msra.mxu0 0.0
    %259 = vmatprep.subr.mxu0 0.0
    %260 = vmatpush1.msra.mxu0 0.0
    %261 = vmatprep.subr.mxu0 0.0
    %262 = vmatpush1.msra.mxu0 0.0
    %263 = vmatprep.subr.mxu0 0.0
    %264 = vmatpush1.msra.mxu0 0.0
    %265 = vmatprep.subr.mxu0 0.0
    %266 = vmatpush1.msra.mxu0 0.0
    %267 = vmatprep.subr.mxu0 0.0
    %268 = vmatpush1.msra.mxu0 0.0
    %269 = vmatprep.subr.mxu0 0.0
    %270 = vmatpush1.msra.mxu0 0.0
    %271 = vmatprep.subr.mxu0 0.0
    %272 = vmatpush1.msra.mxu0 0.0
    %273 = vmatprep.subr.mxu0 0.0
    %274 = vmatpush1.msra.mxu0 0.0
    %275 = vmatprep.subr.mxu0 0.0
    %276 = vmatpush1.msra.mxu0 0.0
    %277 = vmatprep.subr.mxu0 0.0
    %278 = vmatpush1.msra.mxu0 0.0
    %279 = vmatprep.subr.mxu0 0.0
    %280 = vmatpush1.msra.mxu0 0.0
    %281 = vmatprep.subr.mxu0 0.0
    %282 = vmatpush1.msra.mxu0 0.0
    %283 = vmatprep.subr.mxu0 0.0
    %284 = vmatpush1.msra.mxu0 0.0
    %285 = vmatprep.subr.mxu0 0.0
    %286 = vmatpush1.msra.mxu0 0.0
    %287 = vmatprep.subr.mxu0 0.0
    %288 = vmatpush1.msra.mxu0 0.0
    %289 = vmatprep.subr.mxu0 0.0
    %290 = vmatpush1.msra.mxu0 0.0
    %291 = vmatprep.subr.mxu0 0.0
    %292 = vmatpush1.msra.mxu0 0.0
    %293 = vmatprep.subr.mxu0 0.0
    %294 = vmatpush1.msra.mxu0 0.0
    %295 = vmatprep.subr.mxu0 0.0
    %296 = vmatpush1.msra.mxu0 0.0
    %297 = vmatprep.mubr.f32.mxu0 0.0
    %298 = vmatmul.mubr.f32.gmra.mrb[0].mxu0 %v231
    %v299 = vpop.f32.mrb[0].mxu0
    %v300 = vadd.f32 %v228, %v299
    %v301 = vpop.f32.mrb[0].mxu0
    %302 = vdwg.mxu0
    %vm303 = vcmask 31744
    %304 = vst.msk [vmem:[%s7] sm:$0xff] %vm303, %v300
    // Predicated region
    $region34: #{tpu_custom_call.1} parent=1 // pred_check
      _
    $region35: #{tpu_custom_call.1} parent=1 // pred_check_branch
      %306 = sbr.rel (0) target = $region37
    $region36: #{tpu_custom_call.1} parent=1 // pred_region
      _
    $region37: #{tpu_custom_call.1} parent=1 // pred_fallthru
      _
    // Predicated region
    $region38: #{tpu_custom_call.1} parent=1 // pred_check
      _
    $region39: #{tpu_custom_call.1} parent=1 // pred_check_branch
      %308 = sbr.rel (0) target = $region41
    $region40: #{tpu_custom_call.1} parent=1 // pred_region
      _
    $region41: #{tpu_custom_call.1} parent=1 // pred_fallthru
      _
    %309 = vsyncpa [#allocation3], 1

</llo_original>
